<compile_context>
chip_gen: v7x
topology: tpu7x:2x2x1
jax: 0.10.0
libtpu: 0.0.40
codegen_flags: <defaults>
</compile_context>

<pallas_src>
import functools

import jax
import jax.numpy as jnp
from jax import lax
from jax.experimental import pallas as pl
from jax.experimental.pallas import tpu as pltpu

LANE = 128      # TPU lane width (last dim)
SUBLANE = 8     # TPU sublane width (second-to-last dim, f32)


def _round_up(n, m):
    return ((n + m - 1) // m) * m


def _pad_to(a, shape):
    pads = [(0, s - d) for d, s in zip(a.shape, shape)]
    return jnp.pad(a, pads)


# ---------------------------------------------------------------------------
# Kernels
# ---------------------------------------------------------------------------
def _ode_func_kernel(x_ref, w1_ref, b1_ref, w2_ref, b2_ref, o_ref):
    """One f(t, x) = tanh( tanh(x@W1+b1) @ W2 + b2 ) evaluation (padded shapes)."""
    h = jnp.dot(x_ref[...], w1_ref[...], preferred_element_type=jnp.float32)
    h = jnp.tanh(h + b1_ref[...])
    y = jnp.dot(h, w2_ref[...], preferred_element_type=jnp.float32)
    o_ref[...] = jnp.tanh(y + b2_ref[...]).astype(o_ref.dtype)


def _ode_euler_fused_kernel(x_ref, w1_ref, b1_ref, w2_ref, b2_ref, o_ref,
                            *, n_steps, dt):
    """n_steps explicit-Euler steps of dx/dt = f(x), fully inside one kernel.

    Weights are loaded once; bias broadcasts are hoisted outside the loop
    (JAX does not CSE broadcast_in_dim inside the loop body).
    """
    w1 = w1_ref[...]
    w2 = w2_ref[...]
    bsz = x_ref.shape[0]
    b1 = jnp.broadcast_to(b1_ref[...], (bsz, w1.shape[1]))
    b2 = jnp.broadcast_to(b2_ref[...], (bsz, w2.shape[1]))

    def body(_, x):
        h = jnp.tanh(jnp.dot(x, w1, preferred_element_type=jnp.float32) + b1)
        dx = jnp.tanh(jnp.dot(h, w2, preferred_element_type=jnp.float32) + b2)
        return x + dt * dx

    x0 = x_ref[...].astype(jnp.float32)
    o_ref[...] = lax.fori_loop(0, n_steps, body, x0, unroll=True).astype(o_ref.dtype)


# ---------------------------------------------------------------------------
# Wrappers (mirror ODEFunc: the "module" closes over its net's parameters)
# ---------------------------------------------------------------------------
def _pad_params(params):
    w1, b1, w2, b2 = params
    d_in, d_hid = w1.shape
    d_out = w2.shape[1]
    dp_in = _round_up(d_in, LANE)
    dp_hid = _round_up(d_hid, LANE)
    dp_out = _round_up(d_out, LANE)
    w1p = _pad_to(w1, (dp_in, dp_hid))
    b1p = _pad_to(b1, (1, dp_hid))
    w2p = _pad_to(w2, (dp_hid, dp_out))
    b2p = _pad_to(b2, (1, dp_out))
    return (w1p, b1p, w2p, b2p), (d_in, d_hid, d_out, dp_in, dp_hid, dp_out)


def make_ode_func(params):
    """Returns forward(t, x) == ODEFunc.forward(t, x): one fused evaluation."""
    (w1p, b1p, w2p, b2p), (d_in, _, d_out, dp_in, _, dp_out) = _pad_params(params)

    @jax.jit
    def forward(t, x):
        del t  # unused, as in the reference module
        batch = x.shape[0]
        bp = _round_up(batch, SUBLANE)
        xp = _pad_to(x.astype(jnp.float32), (bp, dp_in))
        out = pl.pallas_call(
            _ode_func_kernel,
            out_shape=jax.ShapeDtypeStruct((bp, dp_out), jnp.float32),
            in_specs=[pl.BlockSpec(memory_space=pltpu.MemorySpace.VMEM)] * 5,
            out_specs=pl.BlockSpec(memory_space=pltpu.MemorySpace.VMEM),
        )(xp, w1p, b1p, w2p, b2p)
        return out[:batch, :d_out]

    return forward


def make_fused_euler(params, *, n_steps, dt):
    """Returns integrate(t0, x0): n_steps Euler steps fused in ONE pallas_call."""
    (w1p, b1p, w2p, b2p), (d_in, _, d_out, dp_in, _, dp_out) = _pad_params(params)
    assert d_in == d_out, "fused integrator needs d_out == d_in"

    kernel = functools.partial(_ode_euler_fused_kernel,
                               n_steps=n_steps, dt=float(dt))

    @jax.jit
    def integrate(t0, x0):
        del t0  # the ODE func ignores t
        batch = x0.shape[0]
        bp = _round_up(batch, SUBLANE)
        xp = _pad_to(x0.astype(jnp.float32), (bp, dp_in))
        out = pl.pallas_call(
            kernel,
            out_shape=jax.ShapeDtypeStruct((bp, dp_out), jnp.float32),
            in_specs=[pl.BlockSpec(memory_space=pltpu.MemorySpace.VMEM)] * 5,
            out_specs=pl.BlockSpec(memory_space=pltpu.MemorySpace.VMEM),
        )(xp, w1p, b1p, w2p, b2p)
        return out[:batch, :d_out]

    return integrate


# ---------------------------------------------------------------------------
# Parameters + pure-JAX reference
# ---------------------------------------------------------------------------
def init_params(key, d_in, d_hid, d_out):
    """Deterministic synthetic parameters (stand-in for ode_func_net weights)."""
    k1, k2, k3, k4 = jax.random.split(key, 4)
    s1 = 1.0 / jnp.sqrt(d_in)
    s2 = 1.0 / jnp.sqrt(d_hid)
    w1 = jax.random.uniform(k1, (d_in, d_hid), jnp.float32, -s1, s1)
    b1 = jax.random.uniform(k2, (1, d_hid), jnp.float32, -s1, s1)
    w2 = jax.random.uniform(k3, (d_hid, d_out), jnp.float32, -s2, s2)
    b2 = jax.random.uniform(k4, (1, d_out), jnp.float32, -s2, s2)
    return w1, b1, w2, b2


def reference_forward(t, x, params):
    del t
    w1, b1, w2, b2 = params
    h = jnp.tanh(x @ w1 + b1)
    return jnp.tanh(h @ w2 + b2)


if __name__ == "__main__":
    key = jax.random.PRNGKey(0)
    k_x, k_p = jax.random.split(key)

    batch, d_in, d_hid, d_out = 8, 32, 64, 32
    x = jax.random.normal(k_x, (batch, d_in), jnp.float32)
    t = jnp.float32(0.0)  # unused, matches ODEFunc.forward signature
    params = init_params(k_p, d_in, d_hid, d_out)

    # --- single evaluation (exact ODEFunc.forward semantics) ---
    forward = make_ode_func(params)
    out = jax.block_until_ready(forward(t, x))
    ref = reference_forward(t, x, params)
    assert out.shape == (batch, d_out)
    assert jnp.allclose(out, ref, atol=1e-5, rtol=1e-5)

    # --- fused multi-step evaluation (amortizes launch overhead) ---
    n_steps, dt = 16, 0.05
    integrate = make_fused_euler(params, n_steps=n_steps, dt=dt)
    traj = jax.block_until_ready(integrate(t, x))
    ref_traj = x
    for _ in range(n_steps):
        ref_traj = ref_traj + dt * reference_forward(t, ref_traj, params)
    assert traj.shape == (batch, d_in)
    assert jnp.allclose(traj, ref_traj, atol=1e-4, rtol=1e-4)

    print("KERNEL_OK")
</pallas_src>

<mosaic_0001>
module attributes {stable_mosaic.version = 11 : i64} {
  func.func @_ode_func_kernel(%arg0: memref<8x128xf32, #tpu.memory_space<vmem>>, %arg1: memref<128x128xf32, #tpu.memory_space<vmem>>, %arg2: memref<1x128xf32, #tpu.memory_space<vmem>>, %arg3: memref<128x128xf32, #tpu.memory_space<vmem>>, %arg4: memref<1x128xf32, #tpu.memory_space<vmem>>, %arg5: memref<8x128xf32, #tpu.memory_space<vmem>>) attributes {dimension_semantics = [], scalar_prefetch = 0 : i64, scratch_operands = 0 : i64, tpu.core_type = #tpu.core_type<tc>} {
    %c0 = arith.constant 0 : index
    %c0_0 = arith.constant 0 : index
    %0 = vector.load %arg0[%c0, %c0_0] : memref<8x128xf32, #tpu.memory_space<vmem>>, vector<8x128xf32>
    %c0_1 = arith.constant 0 : index
    %c0_2 = arith.constant 0 : index
    %1 = vector.load %arg1[%c0_1, %c0_2] : memref<128x128xf32, #tpu.memory_space<vmem>>, vector<128x128xf32>
    %cst = arith.constant dense<0.000000e+00> : vector<8x128xf32>
    %2 = tpu.matmul %0, %1, %cst {dimension_numbers = #tpu.dot_dimension_numbers<[1], [0], [0], [1], [0, 0, 1, 1], [], []>} : vector<8x128xf32>, vector<128x128xf32>, vector<8x128xf32> -> vector<8x128xf32>
    %c0_3 = arith.constant 0 : index
    %c0_4 = arith.constant 0 : index
    %3 = vector.load %arg2[%c0_3, %c0_4] : memref<1x128xf32, #tpu.memory_space<vmem>>, vector<1x128xf32>
    %4 = vector.broadcast %3 : vector<1x128xf32> to vector<8x128xf32>
    %5 = arith.addf %2, %4 : vector<8x128xf32>
    %6 = math.tanh %5 : vector<8x128xf32>
    %c0_5 = arith.constant 0 : index
    %c0_6 = arith.constant 0 : index
    %7 = vector.load %arg3[%c0_5, %c0_6] : memref<128x128xf32, #tpu.memory_space<vmem>>, vector<128x128xf32>
    %cst_7 = arith.constant dense<0.000000e+00> : vector<8x128xf32>
    %8 = tpu.matmul %6, %7, %cst_7 {dimension_numbers = #tpu.dot_dimension_numbers<[1], [0], [0], [1], [0, 0, 1, 1], [], []>} : vector<8x128xf32>, vector<128x128xf32>, vector<8x128xf32> -> vector<8x128xf32>
    %c0_8 = arith.constant 0 : index
    %c0_9 = arith.constant 0 : index
    %9 = vector.load %arg4[%c0_8, %c0_9] : memref<1x128xf32, #tpu.memory_space<vmem>>, vector<1x128xf32>
    %10 = vector.broadcast %9 : vector<1x128xf32> to vector<8x128xf32>
    %11 = arith.addf %8, %10 : vector<8x128xf32>
    %12 = math.tanh %11 : vector<8x128xf32>
    %c0_10 = arith.constant 0 : index
    %c0_11 = arith.constant 0 : index
    %13 = vector.load %arg5[%c0_10, %c0_11] : memref<8x128xf32, #tpu.memory_space<vmem>>, vector<8x128xf32>
    tpu.vector_store %arg5[%c0_10, %c0_11], %12 {strides = array<i32>} : memref<8x128xf32, #tpu.memory_space<vmem>>, vector<8x128xf32>,
    return
  }
}

</mosaic_0001>

<llo_original>
// kernel: forward.1
$region0: #{forward.1}
  #allocation0 [shape = 'u32[]', space=smem, size = 0x4, offset = 0x4, fixed_abs, tag = 'smem constant byte address 0x4 - core index']
  #allocation1 [shape = 'u32[144,128]{1,0:T(1,128)}', space=vmem, size = 0x12000, scoped, tag = 'internal scratch']
  %s0 = inlined_call_operand.vmem [shape: f32[8,128], index: 0, kind: input, shape index: {}]
  %s1 = inlined_call_operand.hbm [shape: f32[128,128], index: 1, kind: input, shape index: {}]
  %s2 = inlined_call_operand.vmem [shape: f32[1,128], index: 2, kind: input, shape index: {}]
  %s3 = inlined_call_operand.hbm [shape: f32[128,128], index: 3, kind: input, shape index: {}]
  %s4 = inlined_call_operand.vmem [shape: f32[1,128], index: 4, kind: input, shape index: {}]
  %s5 = inlined_call_operand.hbm [shape: f32[8,128], index: 5, kind: output, shape index: {}]
  %s6 = sld [smem:[#allocation0]]
  $region38: #{forward.1} parent=0
    _
  %s8 = ssub.s32 1, %s6
  %s9 = scalar_select 0, %s8, %s6
  $region1: #{forward.1} parent=0
    #allocation2 [shape = 'u8[65536]{0}', space=vmem, size = 0x10000, scoped, tag = 'input window, operand 1, single buffered']
    #allocation3 [shape = 's32[1]{0}', space=sflag, size = 0x4, scoped, tag = 'scoped memory for forward.1']
    #allocation4 [shape = 's32[1]{0}', space=sflag, size = 0x4, scoped, tag = 'scoped memory for forward.1']
    #allocation5 [shape = 'u8[65536]{0}', space=vmem, size = 0x10000, scoped, tag = 'input window, operand 3, single buffered']
    #allocation6 [shape = 's32[1]{0}', space=sflag, size = 0x4, scoped, tag = 'scoped memory for forward.1']
    #allocation7 [shape = 'u8[4096]{0}', space=vmem, size = 0x1000, scoped, tag = 'output window, operand 0, single buffered']
    %10 = vsyncpa [#allocation3], 0
    %11 = vsyncpa [#allocation6], 0
    %12 = vsyncpa [#allocation4], 0
    // Predicated region
    $region2: #{forward.1} parent=1 // pred_check
      _
    $region3: #{forward.1} parent=1 // pred_check_branch
      %14 = sbr.rel (0) target = $region5
    $region4: #{forward.1} parent=1 // pred_region
      _
    $region5: #{forward.1} parent=1 // pred_fallthru
      _
    // Predicated region
    $region6: #{forward.1} parent=1 // pred_check
      _
    $region7: #{forward.1} parent=1 // pred_check_branch
      %16 = sbr.rel (0) target = $region9
    $region8: #{forward.1} parent=1 // pred_region
      %s18 = ssub.s32 2048, 2048
      %19 = vsyncadd [#allocation3], %s18
      %s20 = sshll.u32 [#allocation2], 4
      %s21 = int_to_ptr.vmem [resolvable:$true] %s20
      %26 = dma.hbm_to_vmem [thread:$0]  %s1, 2048, %s21, [#allocation3], 128, 128, 8
    $region9: #{forward.1} parent=1 // pred_fallthru
      _
    // Predicated region
    $region10: #{forward.1} parent=1 // pred_check
      _
    $region11: #{forward.1} parent=1 // pred_check_branch
      %28 = sbr.rel (0) target = $region13
    $region12: #{forward.1} parent=1 // pred_region
      _
    $region13: #{forward.1} parent=1 // pred_fallthru
      _
    // Predicated region
    $region14: #{forward.1} parent=1 // pred_check
      _
    $region15: #{forward.1} parent=1 // pred_check_branch
      %30 = sbr.rel (0) target = $region17
    $region16: #{forward.1} parent=1 // pred_region
      %s32 = ssub.s32 2048, 2048
      %33 = vsyncadd [#allocation6], %s32
      %s34 = sshll.u32 [#allocation5], 4
      %s35 = int_to_ptr.vmem [resolvable:$true] %s34
      %40 = dma.hbm_to_vmem [thread:$0]  %s3, 2048, %s35, [#allocation6], 128, 128, 8
    $region17: #{forward.1} parent=1 // pred_fallthru
      _
    // Predicated region
    $region18: #{forward.1} parent=1 // pred_check
      _
    $region19: #{forward.1} parent=1 // pred_check_branch
      %42 = sbr.rel (0) target = $region21
    $region20: #{forward.1} parent=1 // pred_region
      _
    $region21: #{forward.1} parent=1 // pred_fallthru
      _
    // Predicated region
    $region22: #{forward.1} parent=1 // pred_check
      _
    $region23: #{forward.1} parent=1 // pred_check_branch
      %44 = sbr.rel (0) target = $region25
    $region24: #{forward.1} parent=1 // pred_region
      %45 = dma.done [#allocation3], 2048
    $region25: #{forward.1} parent=1 // pred_fallthru
      _
    // Predicated region
    $region26: #{forward.1} parent=1 // pred_check
      _
    $region27: #{forward.1} parent=1 // pred_check_branch
      %47 = sbr.rel (0) target = $region29
    $region28: #{forward.1} parent=1 // pred_region
      %48 = dma.done [#allocation6], 2048
    $region29: #{forward.1} parent=1 // pred_fallthru
      _
    %v49 = vld [vmem:[%s0] sm:$0xff]
    %v50 = vld [vmem:[#allocation2] sm:$0xff]
    %v51 = vld [vmem:[#allocation2 + $0x8] sm:$0xff]
    %v52 = vld [vmem:[#allocation2 + $0x10] sm:$0xff]
    %v53 = vld [vmem:[#allocation2 + $0x18] sm:$0xff]
    %v54 = vld [vmem:[#allocation2 + $0x20] sm:$0xff]
    %v55 = vld [vmem:[#allocation2 + $0x28] sm:$0xff]
    %v56 = vld [vmem:[#allocation2 + $0x30] sm:$0xff]
    %v57 = vld [vmem:[#allocation2 + $0x38] sm:$0xff]
    %v58 = vld [vmem:[#allocation2 + $0x40] sm:$0xff]
    %v59 = vld [vmem:[#allocation2 + $0x48] sm:$0xff]
    %v60 = vld [vmem:[#allocation2 + $0x50] sm:$0xff]
    %v61 = vld [vmem:[#allocation2 + $0x58] sm:$0xff]
    %v62 = vld [vmem:[#allocation2 + $0x60] sm:$0xff]
    %v63 = vld [vmem:[#allocation2 + $0x68] sm:$0xff]
    %v64 = vld [vmem:[#allocation2 + $0x70] sm:$0xff]
    %v65 = vld [vmem:[#allocation2 + $0x78] sm:$0xff]
    %v66 = vld [vmem:[%s2] sm:$0x1]
    %v68 = vlaneseq
    %v69 = vshrl.u32 %v68, 7
    %v70 = vsub.s32 0, %v69
    %v71 = vrot.slane %v66, %v70
    %73 = vmatprep.subr.mxu0 0.0
    %74 = vmatpush1.msra.mxu0 %v50
    %75 = vmatprep.subr.mxu0 0.0
    %76 = vmatpush1.msra.mxu0 %v51
    %77 = vmatprep.subr.mxu0 0.0
    %78 = vmatpush1.msra.mxu0 %v52
    %79 = vmatprep.subr.mxu0 0.0
    %80 = vmatpush1.msra.mxu0 %v53
    %81 = vmatprep.subr.mxu0 0.0
    %82 = vmatpush1.msra.mxu0 %v54
    %83 = vmatprep.subr.mxu0 0.0
    %84 = vmatpush1.msra.mxu0 %v55
    %85 = vmatprep.subr.mxu0 0.0
    %86 = vmatpush1.msra.mxu0 %v56
    %87 = vmatprep.subr.mxu0 0.0
    %88 = vmatpush1.msra.mxu0 %v57
    %89 = vmatprep.subr.mxu0 0.0
    %90 = vmatpush1.msra.mxu0 %v58
    %91 = vmatprep.subr.mxu0 0.0
    %92 = vmatpush1.msra.mxu0 %v59
    %93 = vmatprep.subr.mxu0 0.0
    %94 = vmatpush1.msra.mxu0 %v60
    %95 = vmatprep.subr.mxu0 0.0
    %96 = vmatpush1.msra.mxu0 %v61
    %97 = vmatprep.subr.mxu0 0.0
    %98 = vmatpush1.msra.mxu0 %v62
    %99 = vmatprep.subr.mxu0 0.0
    %100 = vmatpush1.msra.mxu0 %v63
    %101 = vmatprep.subr.mxu0 0.0
    %102 = vmatpush1.msra.mxu0 %v64
    %103 = vmatprep.subr.mxu0 0.0
    %104 = vmatpush1.msra.mxu0 %v65
    %105 = vmatprep.subr.mxu0 0.0
    %106 = vmatpush1.msra.mxu0 0.0
    %107 = vmatprep.subr.mxu0 0.0
    %108 = vmatpush1.msra.mxu0 0.0
    %109 = vmatprep.subr.mxu0 0.0
    %110 = vmatpush1.msra.mxu0 0.0
    %111 = vmatprep.subr.mxu0 0.0
    %112 = vmatpush1.msra.mxu0 0.0
    %113 = vmatprep.subr.mxu0 0.0
    %114 = vmatpush1.msra.mxu0 0.0
    %115 = vmatprep.subr.mxu0 0.0
    %116 = vmatpush1.msra.mxu0 0.0
    %117 = vmatprep.subr.mxu0 0.0
    %118 = vmatpush1.msra.mxu0 0.0
    %119 = vmatprep.subr.mxu0 0.0
    %120 = vmatpush1.msra.mxu0 0.0
    %121 = vmatprep.subr.mxu0 0.0
    %122 = vmatpush1.msra.mxu0 0.0
    %123 = vmatprep.subr.mxu0 0.0
    %124 = vmatpush1.msra.mxu0 0.0
    %125 = vmatprep.subr.mxu0 0.0
    %126 = vmatpush1.msra.mxu0 0.0
    %127 = vmatprep.subr.mxu0 0.0
    %128 = vmatpush1.msra.mxu0 0.0
    %129 = vmatprep.subr.mxu0 0.0
    %130 = vmatpush1.msra.mxu0 0.0
    %131 = vmatprep.subr.mxu0 0.0
    %132 = vmatpush1.msra.mxu0 0.0
    %133 = vmatprep.subr.mxu0 0.0
    %134 = vmatpush1.msra.mxu0 0.0
    %135 = vmatprep.subr.mxu0 0.0
    %136 = vmatpush1.msra.mxu0 0.0
    %137 = vmatprep.mubr.f32.mxu0 0.0
    %138 = vmatmul.mubr.f32.gmra.mrb[0].mxu0 %v49
    %v139 = vpop.f32.mrb[0].mxu0
    %v140 = vadd.f32 %v71, %v139
    %v141 = vpop.f32.mrb[0].mxu0
    %142 = vdwg.mxu0
    %v143 = vtanh.pop %v140
    %v144 = vld [vmem:[#allocation5] sm:$0xff]
    %v145 = vld [vmem:[#allocation5 + $0x8] sm:$0xff]
    %v146 = vld [vmem:[#allocation5 + $0x10] sm:$0xff]
    %v147 = vld [vmem:[#allocation5 + $0x18] sm:$0xff]
    %v148 = vld [vmem:[#allocation5 + $0x20] sm:$0xff]
    %v149 = vld [vmem:[#allocation5 + $0x28] sm:$0xff]
    %v150 = vld [vmem:[#allocation5 + $0x30] sm:$0xff]
    %v151 = vld [vmem:[#allocation5 + $0x38] sm:$0xff]
    %v152 = vld [vmem:[#allocation5 + $0x40] sm:$0xff]
    %v153 = vld [vmem:[#allocation5 + $0x48] sm:$0xff]
    %v154 = vld [vmem:[#allocation5 + $0x50] sm:$0xff]
    %v155 = vld [vmem:[#allocation5 + $0x58] sm:$0xff]
    %v156 = vld [vmem:[#allocation5 + $0x60] sm:$0xff]
    %v157 = vld [vmem:[#allocation5 + $0x68] sm:$0xff]
    %v158 = vld [vmem:[#allocation5 + $0x70] sm:$0xff]
    %v159 = vld [vmem:[#allocation5 + $0x78] sm:$0xff]
    %v160 = vld [vmem:[%s4] sm:$0x1]
    %v162 = vlaneseq
    %v163 = vshrl.u32 %v162, 7
    %v164 = vsub.s32 0, %v163
    %v165 = vrot.slane %v160, %v164
    %167 = vmatprep.subr.mxu0 0.0
    %168 = vmatpush1.msra.mxu0 %v144
    %169 = vmatprep.subr.mxu0 0.0
    %170 = vmatpush1.msra.mxu0 %v145
    %171 = vmatprep.subr.mxu0 0.0
    %172 = vmatpush1.msra.mxu0 %v146
    %173 = vmatprep.subr.mxu0 0.0
    %174 = vmatpush1.msra.mxu0 %v147
    %175 = vmatprep.subr.mxu0 0.0
    %176 = vmatpush1.msra.mxu0 %v148
    %177 = vmatprep.subr.mxu0 0.0
    %178 = vmatpush1.msra.mxu0 %v149
    %179 = vmatprep.subr.mxu0 0.0
    %180 = vmatpush1.msra.mxu0 %v150
    %181 = vmatprep.subr.mxu0 0.0
    %182 = vmatpush1.msra.mxu0 %v151
    %183 = vmatprep.subr.mxu0 0.0
    %184 = vmatpush1.msra.mxu0 %v152
    %185 = vmatprep.subr.mxu0 0.0
    %186 = vmatpush1.msra.mxu0 %v153
    %187 = vmatprep.subr.mxu0 0.0
    %188 = vmatpush1.msra.mxu0 %v154
    %189 = vmatprep.subr.mxu0 0.0
    %190 = vmatpush1.msra.mxu0 %v155
    %191 = vmatprep.subr.mxu0 0.0
    %192 = vmatpush1.msra.mxu0 %v156
    %193 = vmatprep.subr.mxu0 0.0
    %194 = vmatpush1.msra.mxu0 %v157
    %195 = vmatprep.subr.mxu0 0.0
    %196 = vmatpush1.msra.mxu0 %v158
    %197 = vmatprep.subr.mxu0 0.0
    %198 = vmatpush1.msra.mxu0 %v159
    %199 = vmatprep.subr.mxu0 0.0
    %200 = vmatpush1.msra.mxu0 0.0
    %201 = vmatprep.subr.mxu0 0.0
    %202 = vmatpush1.msra.mxu0 0.0
    %203 = vmatprep.subr.mxu0 0.0
    %204 = vmatpush1.msra.mxu0 0.0
    %205 = vmatprep.subr.mxu0 0.0
    %206 = vmatpush1.msra.mxu0 0.0
    %207 = vmatprep.subr.mxu0 0.0
    %208 = vmatpush1.msra.mxu0 0.0
    %209 = vmatprep.subr.mxu0 0.0
    %210 = vmatpush1.msra.mxu0 0.0
    %211 = vmatprep.subr.mxu0 0.0
    %212 = vmatpush1.msra.mxu0 0.0
    %213 = vmatprep.subr.mxu0 0.0
    %214 = vmatpush1.msra.mxu0 0.0
    %215 = vmatprep.subr.mxu0 0.0
    %216 = vmatpush1.msra.mxu0 0.0
    %217 = vmatprep.subr.mxu0 0.0
    %218 = vmatpush1.msra.mxu0 0.0
    %219 = vmatprep.subr.mxu0 0.0
    %220 = vmatpush1.msra.mxu0 0.0
    %221 = vmatprep.subr.mxu0 0.0
    %222 = vmatpush1.msra.mxu0 0.0
    %223 = vmatprep.subr.mxu0 0.0
    %224 = vmatpush1.msra.mxu0 0.0
    %225 = vmatprep.subr.mxu0 0.0
    %226 = vmatpush1.msra.mxu0 0.0
    %227 = vmatprep.subr.mxu0 0.0
    %228 = vmatpush1.msra.mxu0 0.0
    %229 = vmatprep.subr.mxu0 0.0
    %230 = vmatpush1.msra.mxu0 0.0
    %231 = vmatprep.mubr.f32.mxu0 0.0
    %232 = vmatmul.mubr.f32.gmra.mrb[0].mxu0 %v143
    %v233 = vpop.f32.mrb[0].mxu0
    %v234 = vadd.f32 %v165, %v233
    %v235 = vpop.f32.mrb[0].mxu0
    %236 = vdwg.mxu0
    %v237 = vtanh.pop %v234
    %238 = vst [vmem:[#allocation7] sm:$0xff] %v237
    // Predicated region
    $region30: #{forward.1} parent=1 // pred_check
      _
    $region31: #{forward.1} parent=1 // pred_check_branch
      %240 = sbr.rel (0) target = $region33
    $region32: #{forward.1} parent=1 // pred_region
      %s242 = ssub.s32 128, 128
      %243 = vsyncadd [#allocation4], %s242
      %s245 = sshll.u32 [#allocation7], 4
      %s246 = int_to_ptr.vmem [resolvable:$true] %s245
      %248 = dma.vmem_to_hbm [thread:$0]  %s246, 128, %s5, [#allocation4]
    $region33: #{forward.1} parent=1 // pred_fallthru
      _
    // Predicated region
    $region34: #{forward.1} parent=1 // pred_check
      _
    $region35: #{forward.1} parent=1 // pred_check_branch
      %250 = sbr.rel (0) target = $region37
    $region36: #{forward.1} parent=1 // pred_region
      %251 = dma.done [#allocation4], 128
    $region37: #{forward.1} parent=1 // pred_fallthru
      _
    %252 = vsyncpa [#allocation3], 1
    %253 = vsyncpa [#allocation6], 1
    %254 = vsyncpa [#allocation4], 1

</llo_original>
